<compile_context>
chip_gen: v5e
topology: v5e:2x2
jax: 0.10.0
libtpu: 0.0.40
codegen_flags: <defaults>
</compile_context>

<pallas_src>
import functools

import jax
import jax.numpy as jnp
from jax import lax
from jax.experimental import pallas as pl
from jax.experimental.pallas import tpu as pltpu


# ----------------------------------------------------------------------------- kernel
def _fused_kernel(p_ref, temp_ref, pool_ref, wp_ref, prm_ref, wh_ref, bh_ref,
                  out_ref, *, inv_d, inv_n):
    """One row-block (TB images x N tokens) per grid step, fully fused.

    Shapes (lane dims padded to multiples of 128):
      p_ref    (TB*N, CK2p)  im2col patches            (compute dtype, streamed)
      temp_ref (TB*N, Dp)    per-row temporal embedding (f32, resident: constant index)
      pool_ref (TB,   TB*N)  0/1 segmented-sum matrix   (compute dtype, resident)
      wp_ref   (CK2p, Dp)    flattened conv weight      (compute dtype, resident)
      prm_ref  (8,    Dp)    rows: b_proj, pe_gamma, pe_beta, norm_gamma, norm_beta (f32)
      wh_ref   (Dp,   Cp)    head weight                (compute dtype, resident)
      bh_ref   (1,    Cp)    head bias                  (f32)
      out_ref  (TB,   Cp)    per-image logits           (f32, lane-dense)
    """
    prm = prm_ref[...]
    b_proj = prm[0:1, :]
    g1, be1 = prm[1:2, :], prm[2:3, :]
    g2, be2 = prm[3:4, :], prm[4:5, :]

    # Conv-as-matmul patch embedding on the MXU, f32 accumulation.
    y = jnp.dot(p_ref[...], wp_ref[...], preferred_element_type=jnp.float32)
    y = y + b_proj

    # LayerNorm over the TRUE embed dim (padded lanes are zero), eps=1e-5; f32 stats.
    mu = jnp.sum(y, axis=-1, keepdims=True) * inv_d
    var = jnp.maximum(jnp.sum(y * y, axis=-1, keepdims=True) * inv_d - mu * mu, 0.0)
    y = (y - mu) * lax.rsqrt(var + 1e-5)
    y = y * g1 + be1                      # zero-padded gamma/beta re-zero the pad lanes
    y = y + temp_ref[...]                 # temporal embedding (zero in pad lanes)

    # TODO(synk): LinearBlock transformer stack (class definition not provided in the
    # reference source) — treated as identity.

    # Final LayerNorm, eps=1e-6.
    mu = jnp.sum(y, axis=-1, keepdims=True) * inv_d
    var = jnp.maximum(jnp.sum(y * y, axis=-1, keepdims=True) * inv_d - mu * mu, 0.0)
    z = (y - mu) * lax.rsqrt(var + 1e-6)
    z = z * g2 + be2

    # Token mean per image BEFORE the head matmul: mean(X) @ W == mean(X @ W).
    # 0/1 pool -> per-image token SUM (exact in bf16), then * 1/N in f32.
    cdt = wh_ref.dtype
    pooled = jnp.dot(pool_ref[...], z.astype(cdt),
                     preferred_element_type=jnp.float32) * inv_n          # (TB, Dp) f32
    out_ref[...] = (jnp.dot(pooled.astype(cdt), wh_ref[...],
                            preferred_element_type=jnp.float32) + bh_ref[...])


# ----------------------------------------------------------------------------- glue
def _round_up(x, m):
    return (x + m - 1) // m * m


def _device_plan():
    """(vmem_limit_bytes, per-step tile VMEM budget, auto compute dtype) per TPU gen."""
    try:
        kind = jax.devices()[0].device_kind.lower()
    except Exception:
        kind = ""
    if "v5e" in kind or ("v5" in kind and "lite" in kind):
        # v5e: 16 MiB scoped default / 128 MiB physical; prefer smaller tiles + deeper pipeline.
        return 24 << 20, 12 << 20, jnp.float32
    if "v6" in kind:
        # v6e: 128 MiB physical VMEM, bf16-native MXU.
        return 48 << 20, 30 << 20, jnp.bfloat16
    if "v7" in kind:
        # v7x: only 64 MiB physical VMEM, 2 TensorCores -> leave headroom, want G >= 2.
        return 32 << 20, 20 << 20, jnp.bfloat16
    return 32 << 20, 18 << 20, jnp.float32


def _choose_tb(BF, F, N, ck2p, dp, cp, cdt_bytes, budget_bytes):
    """Images per row-block.

    Constraints:
      * TB divides BF and TB % num_frames == 0 (so the resident (TB*N, Dp) temp-embed
        slab applies identically to every grid step).
      * TB == BF or TB % 8 == 0 (sublane divisibility of the (TB*N, ...) / (TB, Cp) blocks).
      * Per-step VMEM fit including in-kernel f32 intermediates and double-buffered
        residents (conservative — we don't single-buffer the constant-index inputs).
    Preference: the largest fitting TB that still yields >= 2 grid steps (keeps both v7x
    TensorCores busy and lets the pipeline hide the patch DMA); otherwise the largest
    fitting TB; otherwise the smallest legal TB.
    """
    def legal(tb):
        return BF % tb == 0 and tb % F == 0 and (tb == BF or tb % 8 == 0)

    def fits(tb):
        tbn = tb * N
        streamed = 2 * tbn * ck2p * cdt_bytes            # patches, double-buffered
        streamed += 2 * tb * cp * 4                      # logits out, double-buffered
        resident = 2 * (tbn * dp * 4                     # temp-embed slab (f32)
                        + tb * tbn * cdt_bytes           # 0/1 pooling matrix
                        + ck2p * dp * cdt_bytes          # w_proj
                        + dp * cp * cdt_bytes            # w_head
                        + 8 * dp * 4 + 8 * cp * 4)       # packed params + b_head
        interm = 3 * tbn * dp * 4                        # y / z / elementwise temps (f32)
        return streamed + resident + interm + (1 << 20) <= budget_bytes

    cands = [tb for tb in range(BF, 0, -1) if legal(tb)]
    if not cands:
        return BF
    multi = [tb for tb in cands if BF // tb >= 2 and fits(tb)]
    if multi:
        return multi[0]
    fitting = [tb for tb in cands if fits(tb)]
    if fitting:
        return fitting[0]
    return cands[-1]


def init_params(key, *, in_chans, embed_dim, patch_size, num_frames, num_classes):
    """PyTorch-layout parameters. temp_embed / LN params are randomized (instead of the
    module's zeros/ones init) purely so the test exercises those code paths."""
    kc, kh, k1, k2, k3, k4, k5, k6, k7 = jax.random.split(key, 9)
    fan_out = patch_size * patch_size * embed_dim
    w_conv = jax.random.normal(
        kc, (embed_dim, in_chans, patch_size, patch_size), jnp.float32
    ) * jnp.sqrt(2.0 / fan_out)
    w_head = jax.random.normal(kh, (num_classes, embed_dim), jnp.float32) * 0.02
    return dict(
        w_conv=w_conv,                                                        # (D, C, K, K)
        b_proj=0.1 * jax.random.normal(k1, (embed_dim,), jnp.float32),
        pe_gamma=1.0 + 0.1 * jax.random.normal(k2, (embed_dim,), jnp.float32),
        pe_beta=0.1 * jax.random.normal(k3, (embed_dim,), jnp.float32),
        temp_embed=0.02 * jax.random.normal(
            k4, (1, num_frames, 1, embed_dim), jnp.float32),
        norm_gamma=1.0 + 0.1 * jax.random.normal(k5, (embed_dim,), jnp.float32),
        norm_beta=0.1 * jax.random.normal(k6, (embed_dim,), jnp.float32),
        w_head=w_head,                                                        # (num_classes, D)
        b_head=0.1 * jax.random.normal(k7, (num_classes,), jnp.float32),
    )


@functools.partial(jax.jit,
                   static_argnames=("num_frames", "patch_size", "stride", "compute_dtype"))
def lvit_forward(x, params, *, num_frames, patch_size, stride, compute_dtype=None):
    """x: ((B*F), C, H, W) float32 NCHW.  Returns ((B*F), num_classes) float32.

    Assumes the (B*F) batch axis has frames fastest (frame index = i % num_frames),
    matching the reference view(B, F, N, D) + temp_embed."""
    BF, C, H, W = x.shape
    assert BF % num_frames == 0
    K = patch_size
    pad = K // 2
    w_conv = params["w_conv"]
    D = w_conv.shape[0]
    num_classes = params["w_head"].shape[0]
    F_ = num_frames

    vmem_limit, budget, auto_dtype = _device_plan()
    cdt = jnp.dtype(auto_dtype if compute_dtype is None else compute_dtype)

    # ---- gather-free im2col; feature-last output layout => no wrapper-side transpose.
    # Feature ordering is channel-major (c, kh, kw), matching w_conv.reshape(D, C*K*K).
    patches = lax.conv_general_dilated_patches(
        x, (K, K), (stride, stride), [(pad, pad), (pad, pad)],
        dimension_numbers=("NCHW", "OIHW", "NHWC"),
        precision=lax.Precision.HIGHEST)                       # (BF, Ho, Wo, C*K*K)
    Ho, Wo, CK2 = patches.shape[1], patches.shape[2], patches.shape[3]
    N = Ho * Wo

    # ---- lane-dense padding (multiples of 128)
    CK2p = _round_up(CK2, 128)
    Dp = _round_up(D, 128)
    Cp = _round_up(num_classes, 128)

    patches_p = jnp.pad(patches.reshape(BF * N, CK2).astype(cdt),
                        ((0, 0), (0, CK2p - CK2)))
    w_proj = jnp.pad(w_conv.reshape(D, CK2).T.astype(cdt),
                     ((0, CK2p - CK2), (0, Dp - D)))
    w_head = jnp.pad(params["w_head"].T.astype(cdt),
                     ((0, Dp - D), (0, Cp - num_classes)))
    b_head = jnp.pad(params["b_head"], (0, Cp - num_classes)).reshape(1, Cp)

    # five small (D,) params packed into one (8, Dp) f32 slab (fewer DMA descriptors)
    prm = jnp.stack([params["b_proj"], params["pe_gamma"], params["pe_beta"],
                     params["norm_gamma"], params["norm_beta"]], axis=0)     # (5, D)
    prm = jnp.pad(prm, ((0, 3), (0, Dp - D)))                                # (8, Dp)

    # ---- row-block tiling (TB images per grid step; TB % num_frames == 0)
    TB = _choose_tb(BF, F_, N, CK2p, Dp, Cp, cdt.itemsize, budget)
    G = BF // TB
    TBN = TB * N

    # ---- block-resident temporal-embedding slab (frame index = image index % F;
    #      identical for every grid step because TB % F == 0)
    temp = params["temp_embed"].reshape(F_, D)
    temp_rows = jnp.tile(temp, (TB // F_, 1))                  # (TB, D)
    temp_rows = jnp.repeat(temp_rows, N, axis=0)               # (TB*N, D)
    temp_rows = jnp.pad(temp_rows, ((0, 0), (0, Dp - D)))      # f32, resident

    # 0/1 segmented-sum matrix (exact in bf16); the 1/N mean scale is applied in-kernel in f32.
    seg = jnp.repeat(jnp.arange(TB), N)
    pool = (jnp.arange(TB)[:, None] == seg[None, :]).astype(cdt)            # (TB, TBN)

    kernel = functools.partial(_fused_kernel, inv_d=1.0 / D, inv_n=1.0 / N)
    out = pl.pallas_call(
        kernel,
        out_shape=jax.ShapeDtypeStruct((BF, Cp), jnp.float32),
        grid=(G,),
        in_specs=[
            pl.BlockSpec((TBN, CK2p), lambda g: (g, 0)),       # patches (streamed)
            pl.BlockSpec((TBN, Dp), lambda g: (0, 0)),         # temp embed (resident)
            pl.BlockSpec((TB, TBN), lambda g: (0, 0)),         # pooling matrix (resident)
            pl.BlockSpec((CK2p, Dp), lambda g: (0, 0)),        # w_proj (resident)
            pl.BlockSpec((8, Dp), lambda g: (0, 0)),           # packed small params
            pl.BlockSpec((Dp, Cp), lambda g: (0, 0)),          # w_head (resident)
            pl.BlockSpec((1, Cp), lambda g: (0, 0)),           # b_head
        ],
        out_specs=pl.BlockSpec((TB, Cp), lambda g: (g, 0)),    # lane-dense logits slab
        compiler_params=pltpu.CompilerParams(
            dimension_semantics=("parallel",),
            vmem_limit_bytes=int(vmem_limit)),
    )(patches_p, temp_rows, pool, w_proj, prm, w_head, b_head)

    return out[:, :num_classes]


# ----------------------------------------------------------------------------- reference (plain JAX)
def lvit_forward_ref(x, params, *, num_frames, patch_size, stride):
    K = patch_size
    pad = K // 2
    w = params["w_conv"]
    D = w.shape[0]
    y = lax.conv_general_dilated(
        x, w, (stride, stride), [(pad, pad), (pad, pad)],
        dimension_numbers=("NCHW", "OIHW", "NCHW"),
        precision=lax.Precision.HIGHEST)                        # (BF, D, Ho, Wo)
    y = y + params["b_proj"][None, :, None, None]
    BF = y.shape[0]
    y = y.reshape(BF, D, -1).transpose(0, 2, 1)                 # (BF, N, D)
    mean = y.mean(-1, keepdims=True)
    var = ((y - mean) ** 2).mean(-1, keepdims=True)
    y = (y - mean) / jnp.sqrt(var + 1e-5) * params["pe_gamma"] + params["pe_beta"]
    y = y.reshape(BF // num_frames, num_frames, -1, D) + params["temp_embed"]
    y = y.reshape(BF, -1, D)
    # LinearBlock stack treated as identity (see TODO in kernel).
    mean = y.mean(-1, keepdims=True)
    var = ((y - mean) ** 2).mean(-1, keepdims=True)
    y = (y - mean) / jnp.sqrt(var + 1e-6) * params["norm_gamma"] + params["norm_beta"]
    logits = jnp.einsum("bnd,cd->bnc", y, params["w_head"],
                        precision=lax.Precision.HIGHEST) + params["b_head"]
    return logits.mean(axis=1)


if __name__ == "__main__":
    # Small shapes consistent with the module: batch=1 clip of num_frames=2,
    # in_chans=4, img=16, patch=4, stride=4 -> H=W=5, N=25 tokens, embed_dim=32.
    B, num_frames = 1, 2
    in_chans, img_size = 4, 16
    patch_size, stride = 4, 4
    embed_dim, num_classes = 32, 8

    key = jax.random.PRNGKey(0)
    kx, kp = jax.random.split(key)
    x = jax.random.normal(kx, (B * num_frames, in_chans, img_size, img_size), jnp.float32)
    params = init_params(kp, in_chans=in_chans, embed_dim=embed_dim,
                         patch_size=patch_size, num_frames=num_frames,
                         num_classes=num_classes)

    ref = lvit_forward_ref(x, params, num_frames=num_frames,
                           patch_size=patch_size, stride=stride)

    # f32 compute path (matches the f32 reference tightly).
    out_f32 = jax.block_until_ready(
        lvit_forward(x, params, num_frames=num_frames, patch_size=patch_size,
                     stride=stride, compute_dtype=jnp.float32))
    assert out_f32.shape == (B * num_frames, num_classes), out_f32.shape
    assert jnp.all(jnp.isfinite(out_f32))
    assert jnp.allclose(out_f32, ref, rtol=1e-3, atol=1e-3), (out_f32, ref)

    # bf16 matmul-operand path (v6e/v7x fast path; LN statistics stay f32).
    out_bf16 = jax.block_until_ready(
        lvit_forward(x, params, num_frames=num_frames, patch_size=patch_size,
                     stride=stride, compute_dtype=jnp.bfloat16))
    assert out_bf16.shape == (B * num_frames, num_classes), out_bf16.shape
    assert jnp.all(jnp.isfinite(out_bf16))
    assert jnp.allclose(out_bf16, ref, rtol=3e-2, atol=3e-2), (out_bf16, ref)

    print("KERNEL_OK")
</pallas_src>

<mosaic_0001>
module attributes {stable_mosaic.version = 11 : i64} {
  func.func @_fused_kernel(%arg0: i32, %arg1: memref<50x128xf32, #tpu.memory_space<vmem>>, %arg2: memref<50x128xf32, #tpu.memory_space<vmem>>, %arg3: memref<2x50xf32, #tpu.memory_space<vmem>>, %arg4: memref<128x128xf32, #tpu.memory_space<vmem>>, %arg5: memref<8x128xf32, #tpu.memory_space<vmem>>, %arg6: memref<128x128xf32, #tpu.memory_space<vmem>>, %arg7: memref<1x128xf32, #tpu.memory_space<vmem>>, %arg8: memref<2x128xf32, #tpu.memory_space<vmem>>) attributes {dimension_semantics = [#tpu.dimension_semantics<parallel>], iteration_bounds = array<i64: 1>, scalar_prefetch = 0 : i64, scratch_operands = 0 : i64, tpu.core_type = #tpu.core_type<tc>, window_params = [{transform_indices = @transform_0, window_bounds = array<i64: 50, 128>}, {pipeline_mode = #tpu.pipeline_mode<synchronous>, transform_indices = @transform_1, window_bounds = array<i64: 50, 128>}, {pipeline_mode = #tpu.pipeline_mode<synchronous>, transform_indices = @transform_2, window_bounds = array<i64: 2, 50>}, {pipeline_mode = #tpu.pipeline_mode<synchronous>, transform_indices = @transform_3, window_bounds = array<i64: 128, 128>}, {pipeline_mode = #tpu.pipeline_mode<synchronous>, transform_indices = @transform_4, window_bounds = array<i64: 8, 128>}, {pipeline_mode = #tpu.pipeline_mode<synchronous>, transform_indices = @transform_5, window_bounds = array<i64: 128, 128>}, {pipeline_mode = #tpu.pipeline_mode<synchronous>, transform_indices = @transform_6, window_bounds = array<i64: 1, 128>}, {transform_indices = @transform_7, window_bounds = array<i64: 2, 128>}]} {
    %c0 = arith.constant 0 : index
    %c0_0 = arith.constant 0 : index
    %0 = vector.load %arg5[%c0, %c0_0] : memref<8x128xf32, #tpu.memory_space<vmem>>, vector<8x128xf32>
    %1 = vector.extract_strided_slice %0 {offsets = [0, 0], sizes = [1, 128], strides = [1, 1]} : vector<8x128xf32> to vector<1x128xf32>
    %2 = vector.extract_strided_slice %0 {offsets = [1, 0], sizes = [1, 128], strides = [1, 1]} : vector<8x128xf32> to vector<1x128xf32>
    %3 = vector.extract_strided_slice %0 {offsets = [2, 0], sizes = [1, 128], strides = [1, 1]} : vector<8x128xf32> to vector<1x128xf32>
    %4 = vector.extract_strided_slice %0 {offsets = [3, 0], sizes = [1, 128], strides = [1, 1]} : vector<8x128xf32> to vector<1x128xf32>
    %5 = vector.extract_strided_slice %0 {offsets = [4, 0], sizes = [1, 128], strides = [1, 1]} : vector<8x128xf32> to vector<1x128xf32>
    %c0_1 = arith.constant 0 : index
    %c0_2 = arith.constant 0 : index
    %6 = vector.load %arg1[%c0_1, %c0_2] : memref<50x128xf32, #tpu.memory_space<vmem>>, vector<50x128xf32>
    %c0_3 = arith.constant 0 : index
    %c0_4 = arith.constant 0 : index
    %7 = vector.load %arg4[%c0_3, %c0_4] : memref<128x128xf32, #tpu.memory_space<vmem>>, vector<128x128xf32>
    %cst = arith.constant dense<0.000000e+00> : vector<50x128xf32>
    %8 = tpu.matmul %6, %7, %cst {dimension_numbers = #tpu.dot_dimension_numbers<[1], [0], [0], [1], [0, 0, 1, 1], [], []>} : vector<50x128xf32>, vector<128x128xf32>, vector<50x128xf32> -> vector<50x128xf32>
    %9 = vector.broadcast %1 : vector<1x128xf32> to vector<50x128xf32>
    %10 = arith.addf %8, %9 : vector<50x128xf32>
    %cst_5 = arith.constant dense<0.000000e+00> : vector<50xf32>
    %11 = vector.multi_reduction <add>, %10, %cst_5 [1] : vector<50x128xf32> to vector<50xf32>
    %12 = vector.shape_cast %11 : vector<50xf32> to vector<50x1xf32>
    %cst_6 = arith.constant 3.125000e-02 : f32
    %13 = vector.broadcast %cst_6 : f32 to vector<50x1xf32>
    %14 = arith.mulf %12, %13 : vector<50x1xf32>
    %15 = arith.mulf %10, %10 : vector<50x128xf32>
    %cst_7 = arith.constant dense<0.000000e+00> : vector<50xf32>
    %16 = vector.multi_reduction <add>, %15, %cst_7 [1] : vector<50x128xf32> to vector<50xf32>
    %17 = vector.shape_cast %16 : vector<50xf32> to vector<50x1xf32>
    %cst_8 = arith.constant 3.125000e-02 : f32
    %18 = vector.broadcast %cst_8 : f32 to vector<50x1xf32>
    %19 = arith.mulf %17, %18 : vector<50x1xf32>
    %20 = arith.mulf %14, %14 : vector<50x1xf32>
    %21 = arith.subf %19, %20 : vector<50x1xf32>
    %cst_9 = arith.constant 0.000000e+00 : f32
    %22 = vector.broadcast %cst_9 : f32 to vector<50x1xf32>
    %23 = arith.maximumf %21, %22 : vector<50x1xf32>
    %24 = vector.broadcast %14 : vector<50x1xf32> to vector<50x128xf32>
    %25 = arith.subf %10, %24 : vector<50x128xf32>
    %cst_10 = arith.constant 9.99999974E-6 : f32
    %26 = vector.broadcast %cst_10 : f32 to vector<50x1xf32>
    %27 = arith.addf %23, %26 : vector<50x1xf32>
    %28 = math.rsqrt %27 : vector<50x1xf32>
    %29 = vector.broadcast %28 : vector<50x1xf32> to vector<50x128xf32>
    %30 = arith.mulf %25, %29 : vector<50x128xf32>
    %31 = vector.broadcast %2 : vector<1x128xf32> to vector<50x128xf32>
    %32 = arith.mulf %30, %31 : vector<50x128xf32>
    %33 = vector.broadcast %3 : vector<1x128xf32> to vector<50x128xf32>
    %34 = arith.addf %32, %33 : vector<50x128xf32>
    %c0_11 = arith.constant 0 : index
    %c0_12 = arith.constant 0 : index
    %35 = vector.load %arg2[%c0_11, %c0_12] : memref<50x128xf32, #tpu.memory_space<vmem>>, vector<50x128xf32>
    %36 = arith.addf %34, %35 : vector<50x128xf32>
    %cst_13 = arith.constant dense<0.000000e+00> : vector<50xf32>
    %37 = vector.multi_reduction <add>, %36, %cst_13 [1] : vector<50x128xf32> to vector<50xf32>
    %38 = vector.shape_cast %37 : vector<50xf32> to vector<50x1xf32>
    %cst_14 = arith.constant 3.125000e-02 : f32
    %39 = vector.broadcast %cst_14 : f32 to vector<50x1xf32>
    %40 = arith.mulf %38, %39 : vector<50x1xf32>
    %41 = arith.mulf %36, %36 : vector<50x128xf32>
    %cst_15 = arith.constant dense<0.000000e+00> : vector<50xf32>
    %42 = vector.multi_reduction <add>, %41, %cst_15 [1] : vector<50x128xf32> to vector<50xf32>
    %43 = vector.shape_cast %42 : vector<50xf32> to vector<50x1xf32>
    %cst_16 = arith.constant 3.125000e-02 : f32
    %44 = vector.broadcast %cst_16 : f32 to vector<50x1xf32>
    %45 = arith.mulf %43, %44 : vector<50x1xf32>
    %46 = arith.mulf %40, %40 : vector<50x1xf32>
    %47 = arith.subf %45, %46 : vector<50x1xf32>
    %cst_17 = arith.constant 0.000000e+00 : f32
    %48 = vector.broadcast %cst_17 : f32 to vector<50x1xf32>
    %49 = arith.maximumf %47, %48 : vector<50x1xf32>
    %50 = vector.broadcast %40 : vector<50x1xf32> to vector<50x128xf32>
    %51 = arith.subf %36, %50 : vector<50x128xf32>
    %cst_18 = arith.constant 9.99999997E-7 : f32
    %52 = vector.broadcast %cst_18 : f32 to vector<50x1xf32>
    %53 = arith.addf %49, %52 : vector<50x1xf32>
    %54 = math.rsqrt %53 : vector<50x1xf32>
    %55 = vector.broadcast %54 : vector<50x1xf32> to vector<50x128xf32>
    %56 = arith.mulf %51, %55 : vector<50x128xf32>
    %57 = vector.broadcast %4 : vector<1x128xf32> to vector<50x128xf32>
    %58 = arith.mulf %56, %57 : vector<50x128xf32>
    %59 = vector.broadcast %5 : vector<1x128xf32> to vector<50x128xf32>
    %60 = arith.addf %58, %59 : vector<50x128xf32>
    %c0_19 = arith.constant 0 : index
    %c0_20 = arith.constant 0 : index
    %61 = vector.load %arg3[%c0_19, %c0_20] : memref<2x50xf32, #tpu.memory_space<vmem>>, vector<2x50xf32>
    %cst_21 = arith.constant dense<0.000000e+00> : vector<2x128xf32>
    %62 = tpu.matmul %61, %60, %cst_21 {dimension_numbers = #tpu.dot_dimension_numbers<[1], [0], [0], [1], [0, 0, 1, 1], [], []>} : vector<2x50xf32>, vector<50x128xf32>, vector<2x128xf32> -> vector<2x128xf32>
    %cst_22 = arith.constant 4.000000e-02 : f32
    %63 = vector.broadcast %cst_22 : f32 to vector<2x128xf32>
    %64 = arith.mulf %62, %63 : vector<2x128xf32>
    %c0_23 = arith.constant 0 : index
    %c0_24 = arith.constant 0 : index
    %65 = vector.load %arg6[%c0_23, %c0_24] : memref<128x128xf32, #tpu.memory_space<vmem>>, vector<128x128xf32>
    %cst_25 = arith.constant dense<0.000000e+00> : vector<2x128xf32>
    %66 = tpu.matmul %64, %65, %cst_25 {dimension_numbers = #tpu.dot_dimension_numbers<[1], [0], [0], [1], [0, 0, 1, 1], [], []>} : vector<2x128xf32>, vector<128x128xf32>, vector<2x128xf32> -> vector<2x128xf32>
    %c0_26 = arith.constant 0 : index
    %c0_27 = arith.constant 0 : index
    %67 = vector.load %arg7[%c0_26, %c0_27] : memref<1x128xf32, #tpu.memory_space<vmem>>, vector<1x128xf32>
    %68 = vector.broadcast %67 : vector<1x128xf32> to vector<2x128xf32>
    %69 = arith.addf %66, %68 : vector<2x128xf32>
    %c0_28 = arith.constant 0 : index
    %c0_29 = arith.constant 0 : index
    %70 = vector.load %arg8[%c0_28, %c0_29] : memref<2x128xf32, #tpu.memory_space<vmem>>, vector<2x128xf32>
    tpu.vector_store %arg8[%c0_28, %c0_29], %69 {strides = array<i32>} : memref<2x128xf32, #tpu.memory_space<vmem>>, vector<2x128xf32>,
    return
  }
  func.func @transform_0(%arg0: i32) -> (i32, i32) {
    %c0_i32 = arith.constant 0 : i32
    %c0_i32_0 = arith.constant 0 : i32
    return %arg0, %c0_i32 : i32, i32
  }
  func.func @transform_1(%arg0: i32) -> (i32, i32) {
    %c0_i32 = arith.constant 0 : i32
    %c0_i32_0 = arith.constant 0 : i32
    %c0_i32_1 = arith.constant 0 : i32
    return %c0_i32, %c0_i32_0 : i32, i32
  }
  func.func @transform_2(%arg0: i32) -> (i32, i32) {
    %c0_i32 = arith.constant 0 : i32
    %c0_i32_0 = arith.constant 0 : i32
    %c0_i32_1 = arith.constant 0 : i32
    return %c0_i32, %c0_i32_0 : i32, i32
  }
  func.func @transform_3(%arg0: i32) -> (i32, i32) {
    %c0_i32 = arith.constant 0 : i32
    %c0_i32_0 = arith.constant 0 : i32
    %c0_i32_1 = arith.constant 0 : i32
    return %c0_i32, %c0_i32_0 : i32, i32
  }
  func.func @transform_4(%arg0: i32) -> (i32, i32) {
    %c0_i32 = arith.constant 0 : i32
    %c0_i32_0 = arith.constant 0 : i32
    %c0_i32_1 = arith.constant 0 : i32
    return %c0_i32, %c0_i32_0 : i32, i32
  }
  func.func @transform_5(%arg0: i32) -> (i32, i32) {
    %c0_i32 = arith.constant 0 : i32
    %c0_i32_0 = arith.constant 0 : i32
    %c0_i32_1 = arith.constant 0 : i32
    return %c0_i32, %c0_i32_0 : i32, i32
  }
  func.func @transform_6(%arg0: i32) -> (i32, i32) {
    %c0_i32 = arith.constant 0 : i32
    %c0_i32_0 = arith.constant 0 : i32
    %c0_i32_1 = arith.constant 0 : i32
    return %c0_i32, %c0_i32_0 : i32, i32
  }
  func.func @transform_7(%arg0: i32) -> (i32, i32) {
    %c0_i32 = arith.constant 0 : i32
    %c0_i32_0 = arith.constant 0 : i32
    return %arg0, %c0_i32 : i32, i32
  }
}

</mosaic_0001>

<llo_original>
// kernel: eq.13
$region0: #{eq.13}
  %s0 = inlined_call_operand.vmem [shape: s32[2,25], index: 0, kind: input, shape index: {}]
  %s1 = inlined_call_operand.vmem [shape: s32[50], index: 1, kind: output, shape index: {}]
  $region1: #{eq.13} parent=0
    #allocation0 [shape = 'u8[4096]{0}', space=vmem, size = 0x1000, scoped, tag = 'scoped mem for output reshape']
    #allocation1 [shape = 'u8[4096]{0}', space=vmem, size = 0x1000, scoped, tag = 'scoped mem for input reshape']
    %s3 = ssub.s32 4, 1
    %v4 = vld [vmem:[%s0] sm:%s3]
    %5 = vst [vmem:[#allocation1] sm:%s3] %v4
    %v6 = vld [vmem:[#allocation1] sm:$0x1]
    %vm7 = vcmask 203776
    %8 = vst.msk [vmem:[#allocation0] sm:$0x1] %vm7, %v6
    %s9 = scalar_lea.vmem [#allocation1], 1
    %v10 = vld [vmem:[%s9] sm:$0x1]
    %11 = vrot.lane.b32.xlu0 %v10, 25
    %v12 = vpop.permute.xlu0 %11
    %vm13 = vcmask 408776
    %14 = vst.msk [vmem:[#allocation0] sm:$0x1] %vm13, %v12
    %s16 = ssub.s32 2, 1
    %v17 = vld [vmem:[#allocation0] sm:%s16]
    %s19 = ssub.s32 2, 1
    %20 = vst [vmem:[%s1] sm:%s19] %v17

// kernel: lvit_forward.1
$region0: #{lvit_forward.1}
  #allocation0 [shape = 'u32[]', space=smem, size = 0x4, offset = 0x4, fixed_abs, tag = 'smem constant byte address 0x4 - core index']
  #allocation1 [shape = 'u32[72,128]{1,0:T(1,128)}', space=vmem, size = 0x9000, scoped, tag = 'internal scratch']
  %s0 = inlined_call_operand.vmem [shape: f32[50,128], index: 0, kind: input, shape index: {}]
  %s1 = inlined_call_operand.vmem [shape: f32[50,128], index: 1, kind: input, shape index: {}]
  %s2 = inlined_call_operand.vmem [shape: f32[2,50], index: 2, kind: input, shape index: {}]
  %s3 = inlined_call_operand.vmem [shape: f32[128,128], index: 3, kind: input, shape index: {}]
  %s4 = inlined_call_operand.vmem [shape: f32[8,128], index: 4, kind: input, shape index: {}]
  %s5 = inlined_call_operand.vmem [shape: f32[128,128], index: 5, kind: input, shape index: {}]
  %s6 = inlined_call_operand.vmem [shape: f32[1,128], index: 6, kind: input, shape index: {}]
  %s7 = inlined_call_operand.hbm [shape: f32[2,128], index: 7, kind: output, shape index: {}]
  %s8 = sld [smem:[#allocation0]]
  $region38: #{lvit_forward.1} parent=0
    _
  %s10 = ssub.s32 1, %s8
  %s11 = scalar_select 0, %s10, %s8
  $region1: #{lvit_forward.1} parent=0
    #allocation2 [shape = 'u8[1024]{0}', space=vmem, size = 0x400, scoped, tag = 'output window, operand 0, single buffered']
    #allocation3 [shape = 's32[1]{0}', space=sflag, size = 0x4, scoped, tag = 'scoped memory for lvit_forward.1']
    %12 = vsyncpa [#allocation3], 0
    // Predicated region
    $region2: #{lvit_forward.1} parent=1 // pred_check
      _
    $region3: #{lvit_forward.1} parent=1 // pred_check_branch
      %14 = sbr.rel (0) target = $region5
    $region4: #{lvit_forward.1} parent=1 // pred_region
      _
    $region5: #{lvit_forward.1} parent=1 // pred_fallthru
      _
    // Predicated region
    $region6: #{lvit_forward.1} parent=1 // pred_check
      _
    $region7: #{lvit_forward.1} parent=1 // pred_check_branch
      %16 = sbr.rel (0) target = $region9
    $region8: #{lvit_forward.1} parent=1 // pred_region
      _
    $region9: #{lvit_forward.1} parent=1 // pred_fallthru
      _
    // Predicated region
    $region10: #{lvit_forward.1} parent=1 // pred_check
      _
    $region11: #{lvit_forward.1} parent=1 // pred_check_branch
      %18 = sbr.rel (0) target = $region13
    $region12: #{lvit_forward.1} parent=1 // pred_region
      _
    $region13: #{lvit_forward.1} parent=1 // pred_fallthru
      _
    // Predicated region
    $region14: #{lvit_forward.1} parent=1 // pred_check
      _
    $region15: #{lvit_forward.1} parent=1 // pred_check_branch
      %20 = sbr.rel (0) target = $region17
    $region16: #{lvit_forward.1} parent=1 // pred_region
      _
    $region17: #{lvit_forward.1} parent=1 // pred_fallthru
      _
    // Predicated region
    $region18: #{lvit_forward.1} parent=1 // pred_check
      _
    $region19: #{lvit_forward.1} parent=1 // pred_check_branch
      %22 = sbr.rel (0) target = $region21
    $region20: #{lvit_forward.1} parent=1 // pred_region
      _
    $region21: #{lvit_forward.1} parent=1 // pred_fallthru
      _
    // Predicated region
    $region22: #{lvit_forward.1} parent=1 // pred_check
      _
    $region23: #{lvit_forward.1} parent=1 // pred_check_branch
      %24 = sbr.rel (0) target = $region25
    $region24: #{lvit_forward.1} parent=1 // pred_region
      _
    $region25: #{lvit_forward.1} parent=1 // pred_fallthru
      _
    // Predicated region
    $region26: #{lvit_forward.1} parent=1 // pred_check
      _
    $region27: #{lvit_forward.1} parent=1 // pred_check_branch
      %26 = sbr.rel (0) target = $region29
    $region28: #{lvit_forward.1} parent=1 // pred_region
      _
    $region29: #{lvit_forward.1} parent=1 // pred_fallthru
      _
    %v27 = vld [vmem:[%s4] sm:$0xff]
    %v28 = vld [vmem:[%s0] sm:$0xff]
    %v29 = vld [vmem:[%s0 + $0x8] sm:$0xff]
    %v30 = vld [vmem:[%s0 + $0x10] sm:$0xff]
    %v31 = vld [vmem:[%s0 + $0x18] sm:$0xff]
    %v32 = vld [vmem:[%s0 + $0x20] sm:$0xff]
    %v33 = vld [vmem:[%s0 + $0x28] sm:$0xff]
    %v34 = vld [vmem:[%s0 + $0x30] sm:$0x3]
    %v35 = vld [vmem:[%s3] sm:$0xff]
    %v36 = vld [vmem:[%s3 + $0x8] sm:$0xff]
    %v37 = vld [vmem:[%s3 + $0x10] sm:$0xff]
    %v38 = vld [vmem:[%s3 + $0x18] sm:$0xff]
    %v39 = vld [vmem:[%s3 + $0x20] sm:$0xff]
    %v40 = vld [vmem:[%s3 + $0x28] sm:$0xff]
    %v41 = vld [vmem:[%s3 + $0x30] sm:$0xff]
    %v42 = vld [vmem:[%s3 + $0x38] sm:$0xff]
    %v43 = vld [vmem:[%s3 + $0x40] sm:$0xff]
    %v44 = vld [vmem:[%s3 + $0x48] sm:$0xff]
    %v45 = vld [vmem:[%s3 + $0x50] sm:$0xff]
    %v46 = vld [vmem:[%s3 + $0x58] sm:$0xff]
    %v47 = vld [vmem:[%s3 + $0x60] sm:$0xff]
    %v48 = vld [vmem:[%s3 + $0x68] sm:$0xff]
    %v49 = vld [vmem:[%s3 + $0x70] sm:$0xff]
    %v50 = vld [vmem:[%s3 + $0x78] sm:$0xff]
    %v51 = vperm.slane %v27, 0
    %52 = vmatpush.msra.mxu0 %v50
    %53 = vmatpush.msra.mxu0 %v49
    %54 = vmatpush.msra.mxu0 %v48
    %55 = vmatpush.msra.mxu0 %v47
    %56 = vmatpush.msra.mxu0 %v46
    %57 = vmatpush.msra.mxu0 %v45
    %58 = vmatpush.msra.mxu0 %v44
    %59 = vmatpush.msra.mxu0 %v43
    %60 = vmatpush.msra.mxu0 %v42
    %61 = vmatpush.msra.mxu0 %v41
    %62 = vmatpush.msra.mxu0 %v40
    %63 = vmatpush.msra.mxu0 %v39
    %64 = vmatpush.msra.mxu0 %v38
    %65 = vmatpush.msra.mxu0 %v37
    %66 = vmatpush.msra.mxu0 %v36
    %67 = vmatpush.msra.mxu0 %v35
    %68 = vmatmul.f32.gmra.mxu0 %v28
    %v69 = vpop.f32.mrf.mxu0
    %v70 = vadd.f32 %v51, %v69
    %71 = vmatmul.f32.gmra.mxu0 %v29
    %v72 = vpop.f32.mrf.mxu0
    %v73 = vadd.f32 %v51, %v72
    %74 = vmatmul.f32.gmra.mxu0 %v30
    %v75 = vpop.f32.mrf.mxu0
    %v76 = vadd.f32 %v51, %v75
    %77 = vmatmul.f32.gmra.mxu0 %v31
    %v78 = vpop.f32.mrf.mxu0
    %v79 = vadd.f32 %v51, %v78
    %80 = vmatmul.f32.gmra.mxu0 %v32
    %v81 = vpop.f32.mrf.mxu0
    %v82 = vadd.f32 %v51, %v81
    %83 = vmatmul.f32.gmra.mxu0 %v33
    %v84 = vpop.f32.mrf.mxu0
    %v85 = vadd.f32 %v51, %v84
    %86 = vmatmul.f32.gmra.mxu0 %v34
    %v87 = vpop.f32.mrf.mxu0
    %v88 = vadd.f32 %v51, %v87
    %89 = vdwg.mxu0
    %90 = vadd.xlane.f32.xlu0 %v70
    %v91 = vpop.xlane.xlu0 %90
    %92 = vadd.xlane.f32.xlu0 %v73
    %v93 = vpop.xlane.xlu0 %92
    %94 = vadd.xlane.f32.xlu0 %v76
    %v95 = vpop.xlane.xlu0 %94
    %96 = vadd.xlane.f32.xlu0 %v79
    %v97 = vpop.xlane.xlu0 %96
    %98 = vadd.xlane.f32.xlu0 %v82
    %v99 = vpop.xlane.xlu0 %98
    %100 = vadd.xlane.f32.xlu0 %v85
    %v101 = vpop.xlane.xlu0 %100
    %vm102 = vcmask 1041408
    %v103 = vsel %vm102, %v88, 0.0
    %104 = vadd.xlane.f32.xlu0 %v103
    %v105 = vpop.xlane.xlu0 %104
    %v106 = vmul.f32 %v91, 0.03125
    %v107 = vmul.f32 %v93, 0.03125
    %v108 = vmul.f32 %v95, 0.03125
    %v109 = vmul.f32 %v97, 0.03125
    %v110 = vmul.f32 %v99, 0.03125
    %v111 = vmul.f32 %v101, 0.03125
    %v112 = vmul.f32 %v105, 0.03125
    %v113 = vmul.f32 %v70, %v70
    %v114 = vmul.f32 %v73, %v73
    %v115 = vmul.f32 %v76, %v76
    %v116 = vmul.f32 %v79, %v79
    %v117 = vmul.f32 %v82, %v82
    %v118 = vmul.f32 %v85, %v85
    %v119 = vmul.f32 %v88, %v88
    %120 = vadd.xlane.f32.xlu0 %v113
    %v121 = vpop.xlane.xlu0 %120
    %122 = vadd.xlane.f32.xlu0 %v114
    %v123 = vpop.xlane.xlu0 %122
    %124 = vadd.xlane.f32.xlu0 %v115
    %v125 = vpop.xlane.xlu0 %124
    %126 = vadd.xlane.f32.xlu0 %v116
    %v127 = vpop.xlane.xlu0 %126
    %128 = vadd.xlane.f32.xlu0 %v117
    %v129 = vpop.xlane.xlu0 %128
    %130 = vadd.xlane.f32.xlu0 %v118
    %v131 = vpop.xlane.xlu0 %130
    %v132 = vsel %vm102, %v119, 0.0
    %133 = vadd.xlane.f32.xlu0 %v132
    %v134 = vpop.xlane.xlu0 %133
    %v135 = vmul.f32 %v121, 0.03125
    %v136 = vmul.f32 %v123, 0.03125
    %v137 = vmul.f32 %v125, 0.03125
    %v138 = vmul.f32 %v127, 0.03125
    %v139 = vmul.f32 %v129, 0.03125
    %v140 = vmul.f32 %v131, 0.03125
    %v141 = vmul.f32 %v134, 0.03125
    %v142 = vmul.f32 %v106, %v106
    %v143 = vmul.f32 %v107, %v107
    %v144 = vmul.f32 %v108, %v108
    %v145 = vmul.f32 %v109, %v109
    %v146 = vmul.f32 %v110, %v110
    %v147 = vmul.f32 %v111, %v111
    %v148 = vmul.f32 %v112, %v112
    %v149 = vsub.f32 %v135, %v142
    %v150 = vsub.f32 %v136, %v143
    %v151 = vsub.f32 %v137, %v144
    %v152 = vsub.f32 %v138, %v145
    %v153 = vsub.f32 %v139, %v146
    %v154 = vsub.f32 %v140, %v147
    %v155 = vsub.f32 %v141, %v148
    %v156 = vmax.f32 %v149, 0.0
    %v157 = vmax.f32 %v150, 0.0
    %v158 = vmax.f32 %v151, 0.0
    %v159 = vmax.f32 %v152, 0.0
    %v160 = vmax.f32 %v153, 0.0
    %v161 = vmax.f32 %v154, 0.0
    %v162 = vmax.f32 %v155, 0.0
    %v163 = vsub.f32 %v70, %v106
    %v164 = vsub.f32 %v73, %v107
    %v165 = vsub.f32 %v76, %v108
    %v166 = vsub.f32 %v79, %v109
    %v167 = vsub.f32 %v82, %v110
    %v168 = vsub.f32 %v85, %v111
    %v169 = vsub.f32 %v88, %v112
    %v170 = vadd.f32 %v156, 1e-05
    %v171 = vadd.f32 %v157, 1e-05
    %v172 = vadd.f32 %v158, 1e-05
    %v173 = vadd.f32 %v159, 1e-05
    %v174 = vadd.f32 %v160, 1e-05
    %v175 = vadd.f32 %v161, 1e-05
    %v176 = vadd.f32 %v162, 1e-05
    %v177 = vrsqrt.pop %v170
    %v178 = vmul.f32 %v177, %v170
    %v179 = vmul.f32 %v178, %v177
    %v180 = vmul.f32 0.5, %v179
    %v181 = vsub.f32 1.5, %v180
    %v182 = vmul.f32 %v177, %v181
    %vm183 = vweird.f32 %v170
    %vm184 = vweird.f32 %v177
    %vm185 = vmor %vm183, %vm184
    %v186 = vsel %vm185, %v177, %v182
    %v187 = vrsqrt.pop %v171
    %v188 = vmul.f32 %v187, %v171
    %v189 = vmul.f32 %v188, %v187
    %v190 = vmul.f32 0.5, %v189
    %v191 = vsub.f32 1.5, %v190
    %v192 = vmul.f32 %v187, %v191
    %vm193 = vweird.f32 %v171
    %vm194 = vweird.f32 %v187
    %vm195 = vmor %vm193, %vm194
    %v196 = vsel %vm195, %v187, %v192
    %v197 = vrsqrt.pop %v172
    %v198 = vmul.f32 %v197, %v172
    %v199 = vmul.f32 %v198, %v197
    %v200 = vmul.f32 0.5, %v199
    %v201 = vsub.f32 1.5, %v200
    %v202 = vmul.f32 %v197, %v201
    %vm203 = vweird.f32 %v172
    %vm204 = vweird.f32 %v197
    %vm205 = vmor %vm203, %vm204
    %v206 = vsel %vm205, %v197, %v202
    %v207 = vrsqrt.pop %v173
    %v208 = vmul.f32 %v207, %v173
    %v209 = vmul.f32 %v208, %v207
    %v210 = vmul.f32 0.5, %v209
    %v211 = vsub.f32 1.5, %v210
    %v212 = vmul.f32 %v207, %v211
    %vm213 = vweird.f32 %v173
    %vm214 = vweird.f32 %v207
    %vm215 = vmor %vm213, %vm214
    %v216 = vsel %vm215, %v207, %v212
    %v217 = vrsqrt.pop %v174
    %v218 = vmul.f32 %v217, %v174
    %v219 = vmul.f32 %v218, %v217
    %v220 = vmul.f32 0.5, %v219
    %v221 = vsub.f32 1.5, %v220
    %v222 = vmul.f32 %v217, %v221
    %vm223 = vweird.f32 %v174
    %vm224 = vweird.f32 %v217
    %vm225 = vmor %vm223, %vm224
    %v226 = vsel %vm225, %v217, %v222
    %v227 = vrsqrt.pop %v175
    %v228 = vmul.f32 %v227, %v175
    %v229 = vmul.f32 %v228, %v227
    %v230 = vmul.f32 0.5, %v229
    %v231 = vsub.f32 1.5, %v230
    %v232 = vmul.f32 %v227, %v231
    %vm233 = vweird.f32 %v175
    %vm234 = vweird.f32 %v227
    %vm235 = vmor %vm233, %vm234
    %v236 = vsel %vm235, %v227, %v232
    %v237 = vrsqrt.pop %v176
    %v238 = vmul.f32 %v237, %v176
    %v239 = vmul.f32 %v238, %v237
    %v240 = vmul.f32 0.5, %v239
    %v241 = vsub.f32 1.5, %v240
    %v242 = vmul.f32 %v237, %v241
    %vm243 = vweird.f32 %v176
    %vm244 = vweird.f32 %v237
    %vm245 = vmor %vm243, %vm244
    %v246 = vsel %vm245, %v237, %v242
    %v247 = vmul.f32 %v163, %v186
    %v248 = vmul.f32 %v164, %v196
    %v249 = vmul.f32 %v165, %v206
    %v250 = vmul.f32 %v166, %v216
    %v251 = vmul.f32 %v167, %v226
    %v252 = vmul.f32 %v168, %v236
    %v253 = vmul.f32 %v169, %v246
    %v254 = vperm.slane %v27, 1
    %v255 = vmul.f32 %v247, %v254
    %v256 = vmul.f32 %v248, %v254
    %v257 = vmul.f32 %v249, %v254
    %v258 = vmul.f32 %v250, %v254
    %v259 = vmul.f32 %v251, %v254
    %v260 = vmul.f32 %v252, %v254
    %v261 = vmul.f32 %v253, %v254
    %v262 = vperm.slane %v27, 2
    %v263 = vadd.f32 %v255, %v262
    %v264 = vadd.f32 %v256, %v262
    %v265 = vadd.f32 %v257, %v262
    %v266 = vadd.f32 %v258, %v262
    %v267 = vadd.f32 %v259, %v262
    %v268 = vadd.f32 %v260, %v262
    %v269 = vadd.f32 %v261, %v262
    %v270 = vld [vmem:[%s1] sm:$0xff]
    %v271 = vld [vmem:[%s1 + $0x8] sm:$0xff]
    %v272 = vld [vmem:[%s1 + $0x10] sm:$0xff]
    %v273 = vld [vmem:[%s1 + $0x18] sm:$0xff]
    %v274 = vld [vmem:[%s1 + $0x20] sm:$0xff]
    %v275 = vld [vmem:[%s1 + $0x28] sm:$0xff]
    %v276 = vld [vmem:[%s1 + $0x30] sm:$0x3]
    %v277 = vadd.f32 %v263, %v270
    %v278 = vadd.f32 %v264, %v271
    %v279 = vadd.f32 %v265, %v272
    %v280 = vadd.f32 %v266, %v273
    %v281 = vadd.f32 %v267, %v274
    %v282 = vadd.f32 %v268, %v275
    %v283 = vadd.f32 %v269, %v276
    %284 = vadd.xlane.f32.xlu0 %v277
    %v285 = vpop.xlane.xlu0 %284
    %286 = vadd.xlane.f32.xlu0 %v278
    %v287 = vpop.xlane.xlu0 %286
    %288 = vadd.xlane.f32.xlu0 %v279
    %v289 = vpop.xlane.xlu0 %288
    %290 = vadd.xlane.f32.xlu0 %v280
    %v291 = vpop.xlane.xlu0 %290
    %292 = vadd.xlane.f32.xlu0 %v281
    %v293 = vpop.xlane.xlu0 %292
    %294 = vadd.xlane.f32.xlu0 %v282
    %v295 = vpop.xlane.xlu0 %294
    %v296 = vsel %vm102, %v283, 0.0
    %297 = vadd.xlane.f32.xlu0 %v296
    %v298 = vpop.xlane.xlu0 %297
    %v299 = vmul.f32 %v285, 0.03125
    %v300 = vmul.f32 %v287, 0.03125
    %v301 = vmul.f32 %v289, 0.03125
    %v302 = vmul.f32 %v291, 0.03125
    %v303 = vmul.f32 %v293, 0.03125
    %v304 = vmul.f32 %v295, 0.03125
    %v305 = vmul.f32 %v298, 0.03125
    %v306 = vmul.f32 %v277, %v277
    %v307 = vmul.f32 %v278, %v278
    %v308 = vmul.f32 %v279, %v279
    %v309 = vmul.f32 %v280, %v280
    %v310 = vmul.f32 %v281, %v281
    %v311 = vmul.f32 %v282, %v282
    %v312 = vmul.f32 %v283, %v283
    %313 = vadd.xlane.f32.xlu0 %v306
    %v314 = vpop.xlane.xlu0 %313
    %315 = vadd.xlane.f32.xlu0 %v307
    %v316 = vpop.xlane.xlu0 %315
    %317 = vadd.xlane.f32.xlu0 %v308
    %v318 = vpop.xlane.xlu0 %317
    %319 = vadd.xlane.f32.xlu0 %v309
    %v320 = vpop.xlane.xlu0 %319
    %321 = vadd.xlane.f32.xlu0 %v310
    %v322 = vpop.xlane.xlu0 %321
    %323 = vadd.xlane.f32.xlu0 %v311
    %v324 = vpop.xlane.xlu0 %323
    %v325 = vsel %vm102, %v312, 0.0
    %326 = vadd.xlane.f32.xlu0 %v325
    %v327 = vpop.xlane.xlu0 %326
    %v328 = vmul.f32 %v314, 0.03125
    %v329 = vmul.f32 %v316, 0.03125
    %v330 = vmul.f32 %v318, 0.03125
    %v331 = vmul.f32 %v320, 0.03125
    %v332 = vmul.f32 %v322, 0.03125
    %v333 = vmul.f32 %v324, 0.03125
    %v334 = vmul.f32 %v327, 0.03125
    %v335 = vmul.f32 %v299, %v299
    %v336 = vmul.f32 %v300, %v300
    %v337 = vmul.f32 %v301, %v301
    %v338 = vmul.f32 %v302, %v302
    %v339 = vmul.f32 %v303, %v303
    %v340 = vmul.f32 %v304, %v304
    %v341 = vmul.f32 %v305, %v305
    %v342 = vsub.f32 %v328, %v335
    %v343 = vsub.f32 %v329, %v336
    %v344 = vsub.f32 %v330, %v337
    %v345 = vsub.f32 %v331, %v338
    %v346 = vsub.f32 %v332, %v339
    %v347 = vsub.f32 %v333, %v340
    %v348 = vsub.f32 %v334, %v341
    %v349 = vmax.f32 %v342, 0.0
    %v350 = vmax.f32 %v343, 0.0
    %v351 = vmax.f32 %v344, 0.0
    %v352 = vmax.f32 %v345, 0.0
    %v353 = vmax.f32 %v346, 0.0
    %v354 = vmax.f32 %v347, 0.0
    %v355 = vmax.f32 %v348, 0.0
    %v356 = vsub.f32 %v277, %v299
    %v357 = vsub.f32 %v278, %v300
    %v358 = vsub.f32 %v279, %v301
    %v359 = vsub.f32 %v280, %v302
    %v360 = vsub.f32 %v281, %v303
    %v361 = vsub.f32 %v282, %v304
    %v362 = vsub.f32 %v283, %v305
    %v363 = vadd.f32 %v349, 1e-06
    %v364 = vadd.f32 %v350, 1e-06
    %v365 = vadd.f32 %v351, 1e-06
    %v366 = vadd.f32 %v352, 1e-06
    %v367 = vadd.f32 %v353, 1e-06
    %v368 = vadd.f32 %v354, 1e-06
    %v369 = vadd.f32 %v355, 1e-06
    %v370 = vrsqrt.pop %v363
    %v371 = vmul.f32 %v370, %v363
    %v372 = vmul.f32 %v371, %v370
    %v373 = vmul.f32 0.5, %v372
    %v374 = vsub.f32 1.5, %v373
    %v375 = vmul.f32 %v370, %v374
    %vm376 = vweird.f32 %v363
    %vm377 = vweird.f32 %v370
    %vm378 = vmor %vm376, %vm377
    %v379 = vsel %vm378, %v370, %v375
    %v380 = vrsqrt.pop %v364
    %v381 = vmul.f32 %v380, %v364
    %v382 = vmul.f32 %v381, %v380
    %v383 = vmul.f32 0.5, %v382
    %v384 = vsub.f32 1.5, %v383
    %v385 = vmul.f32 %v380, %v384
    %vm386 = vweird.f32 %v364
    %vm387 = vweird.f32 %v380
    %vm388 = vmor %vm386, %vm387
    %v389 = vsel %vm388, %v380, %v385
    %v390 = vrsqrt.pop %v365
    %v391 = vmul.f32 %v390, %v365
    %v392 = vmul.f32 %v391, %v390
    %v393 = vmul.f32 0.5, %v392
    %v394 = vsub.f32 1.5, %v393
    %v395 = vmul.f32 %v390, %v394
    %vm396 = vweird.f32 %v365
    %vm397 = vweird.f32 %v390
    %vm398 = vmor %vm396, %vm397
    %v399 = vsel %vm398, %v390, %v395
    %v400 = vrsqrt.pop %v366
    %v401 = vmul.f32 %v400, %v366
    %v402 = vmul.f32 %v401, %v400
    %v403 = vmul.f32 0.5, %v402
    %v404 = vsub.f32 1.5, %v403
    %v405 = vmul.f32 %v400, %v404
    %vm406 = vweird.f32 %v366
    %vm407 = vweird.f32 %v400
    %vm408 = vmor %vm406, %vm407
    %v409 = vsel %vm408, %v400, %v405
    %v410 = vrsqrt.pop %v367
    %v411 = vmul.f32 %v410, %v367
    %v412 = vmul.f32 %v411, %v410
    %v413 = vmul.f32 0.5, %v412
    %v414 = vsub.f32 1.5, %v413
    %v415 = vmul.f32 %v410, %v414
    %vm416 = vweird.f32 %v367
    %vm417 = vweird.f32 %v410
    %vm418 = vmor %vm416, %vm417
    %v419 = vsel %vm418, %v410, %v415
    %v420 = vrsqrt.pop %v368
    %v421 = vmul.f32 %v420, %v368
    %v422 = vmul.f32 %v421, %v420
    %v423 = vmul.f32 0.5, %v422
    %v424 = vsub.f32 1.5, %v423
    %v425 = vmul.f32 %v420, %v424
    %vm426 = vweird.f32 %v368
    %vm427 = vweird.f32 %v420
    %vm428 = vmor %vm426, %vm427
    %v429 = vsel %vm428, %v420, %v425
    %v430 = vrsqrt.pop %v369
    %v431 = vmul.f32 %v430, %v369
    %v432 = vmul.f32 %v431, %v430
    %v433 = vmul.f32 0.5, %v432
    %v434 = vsub.f32 1.5, %v433
    %v435 = vmul.f32 %v430, %v434
    %vm436 = vweird.f32 %v369
    %vm437 = vweird.f32 %v430
    %vm438 = vmor %vm436, %vm437
    %v439 = vsel %vm438, %v430, %v435
    %v440 = vmul.f32 %v356, %v379
    %v441 = vmul.f32 %v357, %v389
    %v442 = vmul.f32 %v358, %v399
    %v443 = vmul.f32 %v359, %v409
    %v444 = vmul.f32 %v360, %v419
    %v445 = vmul.f32 %v361, %v429
    %v446 = vmul.f32 %v362, %v439
    %v447 = vperm.slane %v27, 3
    %v448 = vmul.f32 %v440, %v447
    %v449 = vmul.f32 %v441, %v447
    %v450 = vmul.f32 %v442, %v447
    %v451 = vmul.f32 %v443, %v447
    %v452 = vmul.f32 %v444, %v447
    %v453 = vmul.f32 %v445, %v447
    %v454 = vmul.f32 %v446, %v447
    %v455 = vperm.slane %v27, 4
    %v456 = vadd.f32 %v448, %v455
    %v457 = vadd.f32 %v449, %v455
    %v458 = vadd.f32 %v450, %v455
    %v459 = vadd.f32 %v451, %v455
    %v460 = vadd.f32 %v452, %v455
    %v461 = vadd.f32 %v453, %v455
    %v462 = vadd.f32 %v454, %v455
    %v463 = vld [vmem:[%s2] sm:$0x3]
    %vm464 = vcmask 408576
    %v466 = vsel %vm464, %v463, 0
    %v469 = vsel %vm102, %v462, 0
    %471 = vmatpush.msra.mxu0 0.0
    %472 = vmatpush.msra.mxu0 0.0
    %473 = vmatpush.msra.mxu0 0.0
    %474 = vmatpush.msra.mxu0 0.0
    %475 = vmatpush.msra.mxu0 0.0
    %476 = vmatpush.msra.mxu0 0.0
    %477 = vmatpush.msra.mxu0 0.0
    %478 = vmatpush.msra.mxu0 0.0
    %479 = vmatpush.msra.mxu0 0.0
    %480 = vmatpush.msra.mxu0 %v469
    %481 = vmatpush.msra.mxu0 %v461
    %482 = vmatpush.msra.mxu0 %v460
    %483 = vmatpush.msra.mxu0 %v459
    %484 = vmatpush.msra.mxu0 %v458
    %485 = vmatpush.msra.mxu0 %v457
    %486 = vmatpush.msra.mxu0 %v456
    %487 = vmatmul.f32.gmra.mxu0 %v466
    %v488 = vpop.f32.mrf.mxu0
    %v489 = vadd.f32 0.0, %v488
    %490 = vdwg.mxu0
    %v491 = vmul.f32 %v489, 0.04
    %v492 = vld [vmem:[%s5] sm:$0xff]
    %v493 = vld [vmem:[%s5 + $0x8] sm:$0xff]
    %v494 = vld [vmem:[%s5 + $0x10] sm:$0xff]
    %v495 = vld [vmem:[%s5 + $0x18] sm:$0xff]
    %v496 = vld [vmem:[%s5 + $0x20] sm:$0xff]
    %v497 = vld [vmem:[%s5 + $0x28] sm:$0xff]
    %v498 = vld [vmem:[%s5 + $0x30] sm:$0xff]
    %v499 = vld [vmem:[%s5 + $0x38] sm:$0xff]
    %v500 = vld [vmem:[%s5 + $0x40] sm:$0xff]
    %v501 = vld [vmem:[%s5 + $0x48] sm:$0xff]
    %v502 = vld [vmem:[%s5 + $0x50] sm:$0xff]
    %v503 = vld [vmem:[%s5 + $0x58] sm:$0xff]
    %v504 = vld [vmem:[%s5 + $0x60] sm:$0xff]
    %v505 = vld [vmem:[%s5 + $0x68] sm:$0xff]
    %v506 = vld [vmem:[%s5 + $0x70] sm:$0xff]
    %v507 = vld [vmem:[%s5 + $0x78] sm:$0xff]
    %v508 = vld [vmem:[%s6] sm:$0x1]
    %v510 = vperm.slane %v508, 0
    %512 = vmatpush.msra.mxu0 %v507
    %513 = vmatpush.msra.mxu0 %v506
    %514 = vmatpush.msra.mxu0 %v505
    %515 = vmatpush.msra.mxu0 %v504
    %516 = vmatpush.msra.mxu0 %v503
    %517 = vmatpush.msra.mxu0 %v502
    %518 = vmatpush.msra.mxu0 %v501
    %519 = vmatpush.msra.mxu0 %v500
    %520 = vmatpush.msra.mxu0 %v499
    %521 = vmatpush.msra.mxu0 %v498
    %522 = vmatpush.msra.mxu0 %v497
    %523 = vmatpush.msra.mxu0 %v496
    %524 = vmatpush.msra.mxu0 %v495
    %525 = vmatpush.msra.mxu0 %v494
    %526 = vmatpush.msra.mxu0 %v493
    %527 = vmatpush.msra.mxu0 %v492
    %528 = vmatmul.f32.gmra.mxu0 %v491
    %v529 = vpop.f32.mrf.mxu0
    %v530 = vadd.f32 %v510, %v529
    %531 = vdwg.mxu0
    %532 = vst [vmem:[#allocation2] sm:$0x3] %v530
    // Predicated region
    $region30: #{lvit_forward.1} parent=1 // pred_check
      _
    $region31: #{lvit_forward.1} parent=1 // pred_check_branch
      %534 = sbr.rel (0) target = $region33
    $region32: #{lvit_forward.1} parent=1 // pred_region
      %536 = vsyncadd [#allocation3], 0
      %s538 = sshll.u32 [#allocation2], 4
      %s539 = int_to_ptr.vmem [resolvable:$true] %s538
      %s540 = sshll.u32 %s7, 4
      %s541 = int_to_ptr.hbm [resolvable:$true] %s540
      %543 = dma.vmem_to_hbm [thread:$0]  %s539, 32, %s541, [#allocation3]
    $region33: #{lvit_forward.1} parent=1 // pred_fallthru
      _
    // Predicated region
    $region34: #{lvit_forward.1} parent=1 // pred_check
      _
    $region35: #{lvit_forward.1} parent=1 // pred_check_branch
      %545 = sbr.rel (0) target = $region37
    $region36: #{lvit_forward.1} parent=1 // pred_region
      %547 = dma.done [#allocation3], 32
    $region37: #{lvit_forward.1} parent=1 // pred_fallthru
      _
    %548 = vsyncpa [#allocation3], 1

</llo_original>
